<compile_context>
chip_gen: v6e
topology: v6e:2x2x1
jax: 0.10.0
libtpu: 0.0.40
codegen_flags: <defaults>
</compile_context>

<pallas_src>
import functools

import jax
import jax.numpy as jnp
from jax.experimental import pallas as pl
from jax.experimental.pallas import tpu as pltpu

STATE_DIM = 20 * 4            # PyTorch default state_dim
HIDDEN_DIMS = [128, 64, 32]   # PyTorch default hidden_dims
OUT_PAD = 128                 # pad the 1-wide value head to a full lane register
MAX_BATCH_TILE = 512          # rows per grid step for large batches


# ---------------------------------------------------------------------------
# exact (erf-based) GELU, matching torch.nn.GELU(approximate='none')
# ---------------------------------------------------------------------------
_ERF_P = 0.3275911
_ERF_A1 = 0.254829592
_ERF_A2 = -0.284496736
_ERF_A3 = 1.421413741
_ERF_A4 = -1.453152027
_ERF_A5 = 1.061405429
_INV_SQRT2 = 0.7071067811865476


def _erf_approx(x):
    """Abramowitz & Stegun 7.1.26 rational approximation, |err| < 1.5e-7."""
    ax = jnp.abs(x)
    t = 1.0 / (1.0 + _ERF_P * ax)
    poly = ((((_ERF_A5 * t + _ERF_A4) * t + _ERF_A3) * t + _ERF_A2) * t + _ERF_A1) * t
    y = 1.0 - poly * jnp.exp(-(ax * ax))
    return jnp.where(x < 0, -y, y)


def _gelu(x):
    return 0.5 * x * (1.0 + _erf_approx(x * _INV_SQRT2))


# ---------------------------------------------------------------------------
# kernel: fused 4-layer MLP (3x Linear+GELU, then linear value head) in VMEM
# ---------------------------------------------------------------------------
def critic_kernel(x_ref, w1_ref, b1_ref, w2_ref, b2_ref, w3_ref, b3_ref,
                  w4_ref, b4_ref, o_ref):
    h = jnp.dot(x_ref[...], w1_ref[...], preferred_element_type=jnp.float32)
    h = _gelu(h + b1_ref[...])
    h = jnp.dot(h, w2_ref[...], preferred_element_type=jnp.float32)
    h = _gelu(h + b2_ref[...])
    h = jnp.dot(h, w3_ref[...], preferred_element_type=jnp.float32)
    h = _gelu(h + b3_ref[...])
    # value head: no activation. W4/b4 are zero-padded to OUT_PAD columns so
    # this store is a full-lane, unmasked vst (lane-dense output).
    h = jnp.dot(h, w4_ref[...], preferred_element_type=jnp.float32) + b4_ref[...]
    o_ref[...] = h.astype(o_ref.dtype)


@functools.partial(jax.jit, static_argnames=("batch_tile",))
def critic_forward(x, params, *, batch_tile=None):
    """x: [B, state_dim] f32; params: w{i}: [in, out] (pre-transposed), b{i}: [1, out]."""
    B, state_dim = x.shape
    w1, b1 = params["w1"], params["b1"]
    w2, b2 = params["w2"], params["b2"]
    w3, b3 = params["w3"], params["b3"]
    w4, b4 = params["w4"], params["b4"]
    d1, d2, d3 = w1.shape[1], w2.shape[1], w3.shape[1]

    # Zero-pad the 1-wide value head to OUT_PAD lanes -> lane-dense output.
    w4p = jnp.zeros((d3, OUT_PAD), w4.dtype).at[:, : w4.shape[1]].set(w4)
    b4p = jnp.zeros((1, OUT_PAD), b4.dtype).at[:, : b4.shape[1]].set(b4)

    if batch_tile is None:
        # Whole batch in a single grid step when it comfortably fits VMEM
        # (weights + a 512-row activation slab are well under every
        # generation's scoped-VMEM default, incl. v5e's 16 MiB); otherwise
        # 512-row tiles => >=2 steps so both v7x TensorCores get work.
        batch_tile = B if B <= MAX_BATCH_TILE else MAX_BATCH_TILE
    num_tiles = pl.cdiv(B, batch_tile)

    full2d = lambda arr: pl.BlockSpec(arr.shape, lambda i: (0, 0))  # resident

    flops = 2 * B * (state_dim * d1 + d1 * d2 + d2 * d3 + d3 * OUT_PAD)
    transcendentals = B * (d1 + d2 + d3)  # one exp per GELU element
    bytes_accessed = 4 * (
        x.size + w1.size + b1.size + w2.size + b2.size
        + w3.size + b3.size + w4p.size + b4p.size + B * OUT_PAD
    )

    out = pl.pallas_call(
        critic_kernel,
        out_shape=jax.ShapeDtypeStruct((B, OUT_PAD), x.dtype),
        grid=(num_tiles,),
        in_specs=[
            pl.BlockSpec((batch_tile, state_dim), lambda i: (i, 0)),  # x tile
            full2d(w1), full2d(b1),
            full2d(w2), full2d(b2),
            full2d(w3), full2d(b3),
            full2d(w4p), full2d(b4p),
        ],
        out_specs=pl.BlockSpec((batch_tile, OUT_PAD), lambda i: (i, 0)),
        compiler_params=pltpu.CompilerParams(
            dimension_semantics=("parallel",),
        ),
        cost_estimate=pl.CostEstimate(
            flops=flops,
            transcendentals=transcendentals,
            bytes_accessed=bytes_accessed,
        ),
    )(x, w1, b1, w2, b2, w3, b3, w4p, b4p)

    return out[:, :1]  # strip the lane padding -> [B, 1] value estimates


def init_critic_params(key, state_dim=STATE_DIM, hidden_dims=HIDDEN_DIMS):
    """Xavier-uniform weights, zero biases (matches weights_init).
    Weights stored pre-transposed as [in_features, out_features]."""
    params = {}
    dims = [state_dim] + list(hidden_dims) + [1]     # final 1-wide value head
    for idx in range(len(dims) - 1):
        fan_in, fan_out = dims[idx], dims[idx + 1]
        key, sub = jax.random.split(key)
        limit = (6.0 / (fan_in + fan_out)) ** 0.5
        params[f"w{idx + 1}"] = jax.random.uniform(
            sub, (fan_in, fan_out), jnp.float32, minval=-limit, maxval=limit)
        params[f"b{idx + 1}"] = jnp.zeros((1, fan_out), jnp.float32)
    return params


def critic_reference(x, params):
    """Plain-JAX reference: exact erf-based GELU (torch.nn.GELU default)."""
    hp = jax.lax.Precision.HIGHEST
    h = x
    for i in (1, 2, 3):
        z = jnp.dot(h, params[f"w{i}"], precision=hp) + params[f"b{i}"]
        h = jax.nn.gelu(z, approximate=False)
    return jnp.dot(h, params["w4"], precision=hp) + params["b4"]


if __name__ == "__main__":
    key = jax.random.PRNGKey(0)
    k_x, k_p = jax.random.split(key)

    batch = 8
    x = jax.random.normal(k_x, (batch, STATE_DIM), jnp.float32)
    params = init_critic_params(k_p, STATE_DIM, HIDDEN_DIMS)

    out = critic_forward(x, params)
    out = jax.block_until_ready(out)

    ref = critic_reference(x, params)
    assert out.shape == (batch, 1), out.shape
    max_err = float(jnp.max(jnp.abs(out - ref)))
    assert jnp.allclose(out, ref, atol=5e-3, rtol=5e-3), f"mismatch vs reference, max err {max_err}"

    print("KERNEL_OK")
</pallas_src>

<mosaic_0001>
module attributes {stable_mosaic.version = 11 : i64} {
  func.func @critic_kernel(%arg0: i32, %arg1: memref<8x80xf32, #tpu.memory_space<vmem>>, %arg2: memref<80x128xf32, #tpu.memory_space<vmem>>, %arg3: memref<1x128xf32, #tpu.memory_space<vmem>>, %arg4: memref<128x64xf32, #tpu.memory_space<vmem>>, %arg5: memref<1x64xf32, #tpu.memory_space<vmem>>, %arg6: memref<64x32xf32, #tpu.memory_space<vmem>>, %arg7: memref<1x32xf32, #tpu.memory_space<vmem>>, %arg8: memref<32x128xf32, #tpu.memory_space<vmem>>, %arg9: memref<1x128xf32, #tpu.memory_space<vmem>>, %arg10: memref<8x128xf32, #tpu.memory_space<vmem>>) attributes {dimension_semantics = [#tpu.dimension_semantics<parallel>], iteration_bounds = array<i64: 1>, scalar_prefetch = 0 : i64, scratch_operands = 0 : i64, tpu.core_type = #tpu.core_type<tc>, window_params = [{transform_indices = @transform_0, window_bounds = array<i64: 8, 80>}, {pipeline_mode = #tpu.pipeline_mode<synchronous>, transform_indices = @transform_1, window_bounds = array<i64: 80, 128>}, {pipeline_mode = #tpu.pipeline_mode<synchronous>, transform_indices = @transform_2, window_bounds = array<i64: 1, 128>}, {pipeline_mode = #tpu.pipeline_mode<synchronous>, transform_indices = @transform_3, window_bounds = array<i64: 128, 64>}, {pipeline_mode = #tpu.pipeline_mode<synchronous>, transform_indices = @transform_4, window_bounds = array<i64: 1, 64>}, {pipeline_mode = #tpu.pipeline_mode<synchronous>, transform_indices = @transform_5, window_bounds = array<i64: 64, 32>}, {pipeline_mode = #tpu.pipeline_mode<synchronous>, transform_indices = @transform_6, window_bounds = array<i64: 1, 32>}, {pipeline_mode = #tpu.pipeline_mode<synchronous>, transform_indices = @transform_7, window_bounds = array<i64: 32, 128>}, {pipeline_mode = #tpu.pipeline_mode<synchronous>, transform_indices = @transform_8, window_bounds = array<i64: 1, 128>}, {transform_indices = @transform_9, window_bounds = array<i64: 8, 128>}]} {
    %c0 = arith.constant 0 : index
    %c0_0 = arith.constant 0 : index
    %0 = vector.load %arg1[%c0, %c0_0] : memref<8x80xf32, #tpu.memory_space<vmem>>, vector<8x80xf32>
    %c0_1 = arith.constant 0 : index
    %c0_2 = arith.constant 0 : index
    %1 = vector.load %arg2[%c0_1, %c0_2] : memref<80x128xf32, #tpu.memory_space<vmem>>, vector<80x128xf32>
    %cst = arith.constant dense<0.000000e+00> : vector<8x128xf32>
    %2 = tpu.matmul %0, %1, %cst {dimension_numbers = #tpu.dot_dimension_numbers<[1], [0], [0], [1], [0, 0, 1, 1], [], []>} : vector<8x80xf32>, vector<80x128xf32>, vector<8x128xf32> -> vector<8x128xf32>
    %c0_3 = arith.constant 0 : index
    %c0_4 = arith.constant 0 : index
    %3 = vector.load %arg3[%c0_3, %c0_4] : memref<1x128xf32, #tpu.memory_space<vmem>>, vector<1x128xf32>
    %4 = vector.broadcast %3 : vector<1x128xf32> to vector<8x128xf32>
    %5 = arith.addf %2, %4 : vector<8x128xf32>
    %cst_5 = arith.constant 5.000000e-01 : f32
    %6 = vector.broadcast %cst_5 : f32 to vector<8x128xf32>
    %7 = arith.mulf %6, %5 : vector<8x128xf32>
    %cst_6 = arith.constant 0.707106769 : f32
    %8 = vector.broadcast %cst_6 : f32 to vector<8x128xf32>
    %9 = arith.mulf %5, %8 : vector<8x128xf32>
    %10 = math.absf %9 : vector<8x128xf32>
    %cst_7 = arith.constant 0.327591091 : f32
    %11 = vector.broadcast %cst_7 : f32 to vector<8x128xf32>
    %12 = arith.mulf %11, %10 : vector<8x128xf32>
    %cst_8 = arith.constant 1.000000e+00 : f32
    %13 = vector.broadcast %cst_8 : f32 to vector<8x128xf32>
    %14 = arith.addf %13, %12 : vector<8x128xf32>
    %cst_9 = arith.constant 1.000000e+00 : f32
    %15 = vector.broadcast %cst_9 : f32 to vector<8x128xf32>
    %16 = arith.divf %15, %14 : vector<8x128xf32>
    %cst_10 = arith.constant 1.06140542 : f32
    %17 = vector.broadcast %cst_10 : f32 to vector<8x128xf32>
    %18 = arith.mulf %17, %16 : vector<8x128xf32>
    %cst_11 = arith.constant -1.45315206 : f32
    %19 = vector.broadcast %cst_11 : f32 to vector<8x128xf32>
    %20 = arith.addf %18, %19 : vector<8x128xf32>
    %21 = arith.mulf %20, %16 : vector<8x128xf32>
    %cst_12 = arith.constant 1.42141378 : f32
    %22 = vector.broadcast %cst_12 : f32 to vector<8x128xf32>
    %23 = arith.addf %21, %22 : vector<8x128xf32>
    %24 = arith.mulf %23, %16 : vector<8x128xf32>
    %cst_13 = arith.constant -0.284496725 : f32
    %25 = vector.broadcast %cst_13 : f32 to vector<8x128xf32>
    %26 = arith.addf %24, %25 : vector<8x128xf32>
    %27 = arith.mulf %26, %16 : vector<8x128xf32>
    %cst_14 = arith.constant 0.254829586 : f32
    %28 = vector.broadcast %cst_14 : f32 to vector<8x128xf32>
    %29 = arith.addf %27, %28 : vector<8x128xf32>
    %30 = arith.mulf %29, %16 : vector<8x128xf32>
    %31 = arith.mulf %10, %10 : vector<8x128xf32>
    %cst_15 = arith.constant 0.000000e+00 : f32
    %32 = vector.broadcast %cst_15 : f32 to vector<8x128xf32>
    %33 = arith.subf %32, %31 : vector<8x128xf32>
    %34 = math.exp %33 : vector<8x128xf32>
    %35 = arith.mulf %30, %34 : vector<8x128xf32>
    %cst_16 = arith.constant 1.000000e+00 : f32
    %36 = vector.broadcast %cst_16 : f32 to vector<8x128xf32>
    %37 = arith.subf %36, %35 : vector<8x128xf32>
    %cst_17 = arith.constant 0.000000e+00 : f32
    %38 = vector.broadcast %cst_17 : f32 to vector<8x128xf32>
    %39 = arith.cmpf olt, %9, %38 : vector<8x128xf32>
    %cst_18 = arith.constant 0.000000e+00 : f32
    %40 = vector.broadcast %cst_18 : f32 to vector<8x128xf32>
    %41 = arith.subf %40, %37 : vector<8x128xf32>
    %42 = arith.select %39, %41, %37 : vector<8x128xi1>, vector<8x128xf32>
    %cst_19 = arith.constant 1.000000e+00 : f32
    %43 = vector.broadcast %cst_19 : f32 to vector<8x128xf32>
    %44 = arith.addf %43, %42 : vector<8x128xf32>
    %45 = arith.mulf %7, %44 : vector<8x128xf32>
    %c0_20 = arith.constant 0 : index
    %c0_21 = arith.constant 0 : index
    %46 = vector.load %arg4[%c0_20, %c0_21] : memref<128x64xf32, #tpu.memory_space<vmem>>, vector<128x64xf32>
    %cst_22 = arith.constant dense<0.000000e+00> : vector<8x64xf32>
    %47 = tpu.matmul %45, %46, %cst_22 {dimension_numbers = #tpu.dot_dimension_numbers<[1], [0], [0], [1], [0, 0, 1, 1], [], []>} : vector<8x128xf32>, vector<128x64xf32>, vector<8x64xf32> -> vector<8x64xf32>
    %c0_23 = arith.constant 0 : index
    %c0_24 = arith.constant 0 : index
    %48 = vector.load %arg5[%c0_23, %c0_24] : memref<1x64xf32, #tpu.memory_space<vmem>>, vector<1x64xf32>
    %49 = vector.broadcast %48 : vector<1x64xf32> to vector<8x64xf32>
    %50 = arith.addf %47, %49 : vector<8x64xf32>
    %cst_25 = arith.constant 5.000000e-01 : f32
    %51 = vector.broadcast %cst_25 : f32 to vector<8x64xf32>
    %52 = arith.mulf %51, %50 : vector<8x64xf32>
    %cst_26 = arith.constant 0.707106769 : f32
    %53 = vector.broadcast %cst_26 : f32 to vector<8x64xf32>
    %54 = arith.mulf %50, %53 : vector<8x64xf32>
    %55 = math.absf %54 : vector<8x64xf32>
    %cst_27 = arith.constant 0.327591091 : f32
    %56 = vector.broadcast %cst_27 : f32 to vector<8x64xf32>
    %57 = arith.mulf %56, %55 : vector<8x64xf32>
    %cst_28 = arith.constant 1.000000e+00 : f32
    %58 = vector.broadcast %cst_28 : f32 to vector<8x64xf32>
    %59 = arith.addf %58, %57 : vector<8x64xf32>
    %cst_29 = arith.constant 1.000000e+00 : f32
    %60 = vector.broadcast %cst_29 : f32 to vector<8x64xf32>
    %61 = arith.divf %60, %59 : vector<8x64xf32>
    %cst_30 = arith.constant 1.06140542 : f32
    %62 = vector.broadcast %cst_30 : f32 to vector<8x64xf32>
    %63 = arith.mulf %62, %61 : vector<8x64xf32>
    %cst_31 = arith.constant -1.45315206 : f32
    %64 = vector.broadcast %cst_31 : f32 to vector<8x64xf32>
    %65 = arith.addf %63, %64 : vector<8x64xf32>
    %66 = arith.mulf %65, %61 : vector<8x64xf32>
    %cst_32 = arith.constant 1.42141378 : f32
    %67 = vector.broadcast %cst_32 : f32 to vector<8x64xf32>
    %68 = arith.addf %66, %67 : vector<8x64xf32>
    %69 = arith.mulf %68, %61 : vector<8x64xf32>
    %cst_33 = arith.constant -0.284496725 : f32
    %70 = vector.broadcast %cst_33 : f32 to vector<8x64xf32>
    %71 = arith.addf %69, %70 : vector<8x64xf32>
    %72 = arith.mulf %71, %61 : vector<8x64xf32>
    %cst_34 = arith.constant 0.254829586 : f32
    %73 = vector.broadcast %cst_34 : f32 to vector<8x64xf32>
    %74 = arith.addf %72, %73 : vector<8x64xf32>
    %75 = arith.mulf %74, %61 : vector<8x64xf32>
    %76 = arith.mulf %55, %55 : vector<8x64xf32>
    %cst_35 = arith.constant 0.000000e+00 : f32
    %77 = vector.broadcast %cst_35 : f32 to vector<8x64xf32>
    %78 = arith.subf %77, %76 : vector<8x64xf32>
    %79 = math.exp %78 : vector<8x64xf32>
    %80 = arith.mulf %75, %79 : vector<8x64xf32>
    %cst_36 = arith.constant 1.000000e+00 : f32
    %81 = vector.broadcast %cst_36 : f32 to vector<8x64xf32>
    %82 = arith.subf %81, %80 : vector<8x64xf32>
    %cst_37 = arith.constant 0.000000e+00 : f32
    %83 = vector.broadcast %cst_37 : f32 to vector<8x64xf32>
    %84 = arith.cmpf olt, %54, %83 : vector<8x64xf32>
    %cst_38 = arith.constant 0.000000e+00 : f32
    %85 = vector.broadcast %cst_38 : f32 to vector<8x64xf32>
    %86 = arith.subf %85, %82 : vector<8x64xf32>
    %87 = arith.select %84, %86, %82 : vector<8x64xi1>, vector<8x64xf32>
    %cst_39 = arith.constant 1.000000e+00 : f32
    %88 = vector.broadcast %cst_39 : f32 to vector<8x64xf32>
    %89 = arith.addf %88, %87 : vector<8x64xf32>
    %90 = arith.mulf %52, %89 : vector<8x64xf32>
    %c0_40 = arith.constant 0 : index
    %c0_41 = arith.constant 0 : index
    %91 = vector.load %arg6[%c0_40, %c0_41] : memref<64x32xf32, #tpu.memory_space<vmem>>, vector<64x32xf32>
    %cst_42 = arith.constant dense<0.000000e+00> : vector<8x32xf32>
    %92 = tpu.matmul %90, %91, %cst_42 {dimension_numbers = #tpu.dot_dimension_numbers<[1], [0], [0], [1], [0, 0, 1, 1], [], []>} : vector<8x64xf32>, vector<64x32xf32>, vector<8x32xf32> -> vector<8x32xf32>
    %c0_43 = arith.constant 0 : index
    %c0_44 = arith.constant 0 : index
    %93 = vector.load %arg7[%c0_43, %c0_44] : memref<1x32xf32, #tpu.memory_space<vmem>>, vector<1x32xf32>
    %94 = vector.broadcast %93 : vector<1x32xf32> to vector<8x32xf32>
    %95 = arith.addf %92, %94 : vector<8x32xf32>
    %cst_45 = arith.constant 5.000000e-01 : f32
    %96 = vector.broadcast %cst_45 : f32 to vector<8x32xf32>
    %97 = arith.mulf %96, %95 : vector<8x32xf32>
    %cst_46 = arith.constant 0.707106769 : f32
    %98 = vector.broadcast %cst_46 : f32 to vector<8x32xf32>
    %99 = arith.mulf %95, %98 : vector<8x32xf32>
    %100 = math.absf %99 : vector<8x32xf32>
    %cst_47 = arith.constant 0.327591091 : f32
    %101 = vector.broadcast %cst_47 : f32 to vector<8x32xf32>
    %102 = arith.mulf %101, %100 : vector<8x32xf32>
    %cst_48 = arith.constant 1.000000e+00 : f32
    %103 = vector.broadcast %cst_48 : f32 to vector<8x32xf32>
    %104 = arith.addf %103, %102 : vector<8x32xf32>
    %cst_49 = arith.constant 1.000000e+00 : f32
    %105 = vector.broadcast %cst_49 : f32 to vector<8x32xf32>
    %106 = arith.divf %105, %104 : vector<8x32xf32>
    %cst_50 = arith.constant 1.06140542 : f32
    %107 = vector.broadcast %cst_50 : f32 to vector<8x32xf32>
    %108 = arith.mulf %107, %106 : vector<8x32xf32>
    %cst_51 = arith.constant -1.45315206 : f32
    %109 = vector.broadcast %cst_51 : f32 to vector<8x32xf32>
    %110 = arith.addf %108, %109 : vector<8x32xf32>
    %111 = arith.mulf %110, %106 : vector<8x32xf32>
    %cst_52 = arith.constant 1.42141378 : f32
    %112 = vector.broadcast %cst_52 : f32 to vector<8x32xf32>
    %113 = arith.addf %111, %112 : vector<8x32xf32>
    %114 = arith.mulf %113, %106 : vector<8x32xf32>
    %cst_53 = arith.constant -0.284496725 : f32
    %115 = vector.broadcast %cst_53 : f32 to vector<8x32xf32>
    %116 = arith.addf %114, %115 : vector<8x32xf32>
    %117 = arith.mulf %116, %106 : vector<8x32xf32>
    %cst_54 = arith.constant 0.254829586 : f32
    %118 = vector.broadcast %cst_54 : f32 to vector<8x32xf32>
    %119 = arith.addf %117, %118 : vector<8x32xf32>
    %120 = arith.mulf %119, %106 : vector<8x32xf32>
    %121 = arith.mulf %100, %100 : vector<8x32xf32>
    %cst_55 = arith.constant 0.000000e+00 : f32
    %122 = vector.broadcast %cst_55 : f32 to vector<8x32xf32>
    %123 = arith.subf %122, %121 : vector<8x32xf32>
    %124 = math.exp %123 : vector<8x32xf32>
    %125 = arith.mulf %120, %124 : vector<8x32xf32>
    %cst_56 = arith.constant 1.000000e+00 : f32
    %126 = vector.broadcast %cst_56 : f32 to vector<8x32xf32>
    %127 = arith.subf %126, %125 : vector<8x32xf32>
    %cst_57 = arith.constant 0.000000e+00 : f32
    %128 = vector.broadcast %cst_57 : f32 to vector<8x32xf32>
    %129 = arith.cmpf olt, %99, %128 : vector<8x32xf32>
    %cst_58 = arith.constant 0.000000e+00 : f32
    %130 = vector.broadcast %cst_58 : f32 to vector<8x32xf32>
    %131 = arith.subf %130, %127 : vector<8x32xf32>
    %132 = arith.select %129, %131, %127 : vector<8x32xi1>, vector<8x32xf32>
    %cst_59 = arith.constant 1.000000e+00 : f32
    %133 = vector.broadcast %cst_59 : f32 to vector<8x32xf32>
    %134 = arith.addf %133, %132 : vector<8x32xf32>
    %135 = arith.mulf %97, %134 : vector<8x32xf32>
    %c0_60 = arith.constant 0 : index
    %c0_61 = arith.constant 0 : index
    %136 = vector.load %arg8[%c0_60, %c0_61] : memref<32x128xf32, #tpu.memory_space<vmem>>, vector<32x128xf32>
    %cst_62 = arith.constant dense<0.000000e+00> : vector<8x128xf32>
    %137 = tpu.matmul %135, %136, %cst_62 {dimension_numbers = #tpu.dot_dimension_numbers<[1], [0], [0], [1], [0, 0, 1, 1], [], []>} : vector<8x32xf32>, vector<32x128xf32>, vector<8x128xf32> -> vector<8x128xf32>
    %c0_63 = arith.constant 0 : index
    %c0_64 = arith.constant 0 : index
    %138 = vector.load %arg9[%c0_63, %c0_64] : memref<1x128xf32, #tpu.memory_space<vmem>>, vector<1x128xf32>
    %139 = vector.broadcast %138 : vector<1x128xf32> to vector<8x128xf32>
    %140 = arith.addf %137, %139 : vector<8x128xf32>
    %c0_65 = arith.constant 0 : index
    %c0_66 = arith.constant 0 : index
    %141 = vector.load %arg10[%c0_65, %c0_66] : memref<8x128xf32, #tpu.memory_space<vmem>>, vector<8x128xf32>
    tpu.vector_store %arg10[%c0_65, %c0_66], %140 {strides = array<i32>} : memref<8x128xf32, #tpu.memory_space<vmem>>, vector<8x128xf32>,
    return
  }
  func.func @transform_0(%arg0: i32) -> (i32, i32) {
    %c0_i32 = arith.constant 0 : i32
    %c0_i32_0 = arith.constant 0 : i32
    return %arg0, %c0_i32 : i32, i32
  }
  func.func @transform_1(%arg0: i32) -> (i32, i32) {
    %c0_i32 = arith.constant 0 : i32
    %c0_i32_0 = arith.constant 0 : i32
    %c0_i32_1 = arith.constant 0 : i32
    return %c0_i32, %c0_i32_0 : i32, i32
  }
  func.func @transform_2(%arg0: i32) -> (i32, i32) {
    %c0_i32 = arith.constant 0 : i32
    %c0_i32_0 = arith.constant 0 : i32
    %c0_i32_1 = arith.constant 0 : i32
    return %c0_i32, %c0_i32_0 : i32, i32
  }
  func.func @transform_3(%arg0: i32) -> (i32, i32) {
    %c0_i32 = arith.constant 0 : i32
    %c0_i32_0 = arith.constant 0 : i32
    %c0_i32_1 = arith.constant 0 : i32
    return %c0_i32, %c0_i32_0 : i32, i32
  }
  func.func @transform_4(%arg0: i32) -> (i32, i32) {
    %c0_i32 = arith.constant 0 : i32
    %c0_i32_0 = arith.constant 0 : i32
    %c0_i32_1 = arith.constant 0 : i32
    return %c0_i32, %c0_i32_0 : i32, i32
  }
  func.func @transform_5(%arg0: i32) -> (i32, i32) {
    %c0_i32 = arith.constant 0 : i32
    %c0_i32_0 = arith.constant 0 : i32
    %c0_i32_1 = arith.constant 0 : i32
    return %c0_i32, %c0_i32_0 : i32, i32
  }
  func.func @transform_6(%arg0: i32) -> (i32, i32) {
    %c0_i32 = arith.constant 0 : i32
    %c0_i32_0 = arith.constant 0 : i32
    %c0_i32_1 = arith.constant 0 : i32
    return %c0_i32, %c0_i32_0 : i32, i32
  }
  func.func @transform_7(%arg0: i32) -> (i32, i32) {
    %c0_i32 = arith.constant 0 : i32
    %c0_i32_0 = arith.constant 0 : i32
    %c0_i32_1 = arith.constant 0 : i32
    return %c0_i32, %c0_i32_0 : i32, i32
  }
  func.func @transform_8(%arg0: i32) -> (i32, i32) {
    %c0_i32 = arith.constant 0 : i32
    %c0_i32_0 = arith.constant 0 : i32
    %c0_i32_1 = arith.constant 0 : i32
    return %c0_i32, %c0_i32_0 : i32, i32
  }
  func.func @transform_9(%arg0: i32) -> (i32, i32) {
    %c0_i32 = arith.constant 0 : i32
    %c0_i32_0 = arith.constant 0 : i32
    return %arg0, %c0_i32 : i32, i32
  }
}

</mosaic_0001>

<llo_original>
// kernel: critic_forward.1
$region0: #{critic_forward.1}
  #allocation0 [shape = 'u32[]', space=smem, size = 0x4, offset = 0x4, fixed_abs, tag = 'smem constant byte address 0x4 - core index']
  #allocation1 [shape = 'u32[144,128]{1,0:T(1,128)}', space=vmem, size = 0x12000, scoped, tag = 'internal scratch']
  %s0 = inlined_call_operand.vmem [shape: f32[8,80], index: 0, kind: input, shape index: {}]
  %s1 = inlined_call_operand.vmem [shape: f32[80,128], index: 1, kind: input, shape index: {}]
  %s2 = inlined_call_operand.vmem [shape: f32[1,128], index: 2, kind: input, shape index: {}]
  %s3 = inlined_call_operand.vmem [shape: f32[128,64], index: 3, kind: input, shape index: {}]
  %s4 = inlined_call_operand.vmem [shape: f32[1,64], index: 4, kind: input, shape index: {}]
  %s5 = inlined_call_operand.vmem [shape: f32[64,32], index: 5, kind: input, shape index: {}]
  %s6 = inlined_call_operand.vmem [shape: f32[1,32], index: 6, kind: input, shape index: {}]
  %s7 = inlined_call_operand.vmem [shape: f32[32,128], index: 7, kind: input, shape index: {}]
  %s8 = inlined_call_operand.vmem [shape: f32[1,128], index: 8, kind: input, shape index: {}]
  %s9 = inlined_call_operand.vmem [shape: f32[8,128], index: 9, kind: output, shape index: {}]
  %s10 = sld [smem:[#allocation0]]
  $region46: #{critic_forward.1} parent=0
    _
  %s12 = ssub.s32 1, %s10
  %s13 = scalar_select 0, %s12, %s10
  // Predicated region
  $region2: #{critic_forward.1} parent=0 // pred_check
    _
  $region3: #{critic_forward.1} parent=0 // pred_check_branch
    %15 = sbr.rel (0) target = $region5
  $region4: #{critic_forward.1} parent=0 // pred_region
    _
  $region5: #{critic_forward.1} parent=0 // pred_fallthru
    _
  // Predicated region
  $region6: #{critic_forward.1} parent=0 // pred_check
    _
  $region7: #{critic_forward.1} parent=0 // pred_check_branch
    %17 = sbr.rel (0) target = $region9
  $region8: #{critic_forward.1} parent=0 // pred_region
    _
  $region9: #{critic_forward.1} parent=0 // pred_fallthru
    _
  // Predicated region
  $region10: #{critic_forward.1} parent=0 // pred_check
    _
  $region11: #{critic_forward.1} parent=0 // pred_check_branch
    %19 = sbr.rel (0) target = $region13
  $region12: #{critic_forward.1} parent=0 // pred_region
    _
  $region13: #{critic_forward.1} parent=0 // pred_fallthru
    _
  // Predicated region
  $region14: #{critic_forward.1} parent=0 // pred_check
    _
  $region15: #{critic_forward.1} parent=0 // pred_check_branch
    %21 = sbr.rel (0) target = $region17
  $region16: #{critic_forward.1} parent=0 // pred_region
    _
  $region17: #{critic_forward.1} parent=0 // pred_fallthru
    _
  // Predicated region
  $region18: #{critic_forward.1} parent=0 // pred_check
    _
  $region19: #{critic_forward.1} parent=0 // pred_check_branch
    %23 = sbr.rel (0) target = $region21
  $region20: #{critic_forward.1} parent=0 // pred_region
    _
  $region21: #{critic_forward.1} parent=0 // pred_fallthru
    _
  // Predicated region
  $region22: #{critic_forward.1} parent=0 // pred_check
    _
  $region23: #{critic_forward.1} parent=0 // pred_check_branch
    %25 = sbr.rel (0) target = $region25
  $region24: #{critic_forward.1} parent=0 // pred_region
    _
  $region25: #{critic_forward.1} parent=0 // pred_fallthru
    _
  // Predicated region
  $region26: #{critic_forward.1} parent=0 // pred_check
    _
  $region27: #{critic_forward.1} parent=0 // pred_check_branch
    %27 = sbr.rel (0) target = $region29
  $region28: #{critic_forward.1} parent=0 // pred_region
    _
  $region29: #{critic_forward.1} parent=0 // pred_fallthru
    _
  // Predicated region
  $region30: #{critic_forward.1} parent=0 // pred_check
    _
  $region31: #{critic_forward.1} parent=0 // pred_check_branch
    %29 = sbr.rel (0) target = $region33
  $region32: #{critic_forward.1} parent=0 // pred_region
    _
  $region33: #{critic_forward.1} parent=0 // pred_fallthru
    _
  // Predicated region
  $region34: #{critic_forward.1} parent=0 // pred_check
    _
  $region35: #{critic_forward.1} parent=0 // pred_check_branch
    %31 = sbr.rel (0) target = $region37
  $region36: #{critic_forward.1} parent=0 // pred_region
    _
  $region37: #{critic_forward.1} parent=0 // pred_fallthru
    _
  %v32 = vld [vmem:[%s0] sm:$0xff]
  %v33 = vld [vmem:[%s1] sm:$0xff]
  %v34 = vld [vmem:[%s1 + $0x8] sm:$0xff]
  %v35 = vld [vmem:[%s1 + $0x10] sm:$0xff]
  %v36 = vld [vmem:[%s1 + $0x18] sm:$0xff]
  %v37 = vld [vmem:[%s1 + $0x20] sm:$0xff]
  %v38 = vld [vmem:[%s1 + $0x28] sm:$0xff]
  %v39 = vld [vmem:[%s1 + $0x30] sm:$0xff]
  %v40 = vld [vmem:[%s1 + $0x38] sm:$0xff]
  %v41 = vld [vmem:[%s1 + $0x40] sm:$0xff]
  %v42 = vld [vmem:[%s1 + $0x48] sm:$0xff]
  %v43 = vld [vmem:[%s2] sm:$0x1]
  %v45 = vlaneseq
  %v46 = vshrl.u32 %v45, 7
  %v47 = vsub.s32 0, %v46
  %v48 = vrot.slane %v43, %v47
  %vm50 = vcmask 654336
  %v52 = vsel %vm50, %v32, 0
  %54 = vmatprep.subr.mxu0 0.0
  %55 = vmatpush1.msra.mxu0 0.0
  %56 = vmatprep.subr.mxu0 0.0
  %57 = vmatpush1.msra.mxu0 0.0
  %58 = vmatprep.subr.mxu0 0.0
  %59 = vmatpush1.msra.mxu0 0.0
  %60 = vmatprep.subr.mxu0 0.0
  %61 = vmatpush1.msra.mxu0 0.0
  %62 = vmatprep.subr.mxu0 0.0
  %63 = vmatpush1.msra.mxu0 0.0
  %64 = vmatprep.subr.mxu0 0.0
  %65 = vmatpush1.msra.mxu0 0.0
  %66 = vmatprep.subr.mxu0 0.0
  %67 = vmatpush1.msra.mxu0 %v42
  %68 = vmatprep.subr.mxu0 0.0
  %69 = vmatpush1.msra.mxu0 %v41
  %70 = vmatprep.subr.mxu0 0.0
  %71 = vmatpush1.msra.mxu0 %v40
  %72 = vmatprep.subr.mxu0 0.0
  %73 = vmatpush1.msra.mxu0 %v39
  %74 = vmatprep.subr.mxu0 0.0
  %75 = vmatpush1.msra.mxu0 %v38
  %76 = vmatprep.subr.mxu0 0.0
  %77 = vmatpush1.msra.mxu0 %v37
  %78 = vmatprep.subr.mxu0 0.0
  %79 = vmatpush1.msra.mxu0 %v36
  %80 = vmatprep.subr.mxu0 0.0
  %81 = vmatpush1.msra.mxu0 %v35
  %82 = vmatprep.subr.mxu0 0.0
  %83 = vmatpush1.msra.mxu0 %v34
  %84 = vmatprep.subr.mxu0 0.0
  %85 = vmatpush1.msra.mxu0 %v33
  %86 = vmatprep.subr.mxu0 0.0
  %87 = vmatpush2.msra.mxu0 0.0
  %88 = vmatprep.subr.mxu0 0.0
  %89 = vmatpush2.msra.mxu0 0.0
  %90 = vmatprep.subr.mxu0 0.0
  %91 = vmatpush2.msra.mxu0 0.0
  %92 = vmatprep.subr.mxu0 0.0
  %93 = vmatpush2.msra.mxu0 0.0
  %94 = vmatprep.subr.mxu0 0.0
  %95 = vmatpush2.msra.mxu0 0.0
  %96 = vmatprep.subr.mxu0 0.0
  %97 = vmatpush2.msra.mxu0 0.0
  %98 = vmatprep.subr.mxu0 0.0
  %99 = vmatpush2.msra.mxu0 0.0
  %100 = vmatprep.subr.mxu0 0.0
  %101 = vmatpush2.msra.mxu0 0.0
  %102 = vmatprep.subr.mxu0 0.0
  %103 = vmatpush2.msra.mxu0 0.0
  %104 = vmatprep.subr.mxu0 0.0
  %105 = vmatpush2.msra.mxu0 0.0
  %106 = vmatprep.subr.mxu0 0.0
  %107 = vmatpush2.msra.mxu0 0.0
  %108 = vmatprep.subr.mxu0 0.0
  %109 = vmatpush2.msra.mxu0 0.0
  %110 = vmatprep.subr.mxu0 0.0
  %111 = vmatpush2.msra.mxu0 0.0
  %112 = vmatprep.subr.mxu0 0.0
  %113 = vmatpush2.msra.mxu0 0.0
  %114 = vmatprep.subr.mxu0 0.0
  %115 = vmatpush2.msra.mxu0 0.0
  %116 = vmatprep.subr.mxu0 0.0
  %117 = vmatpush2.msra.mxu0 0.0
  %118 = vmatprep.mubr.f32.mxu0 0.0
  %119 = vmatmul.mubr.f32.gmra.mxu0 %v52
  %v120 = vpop.f32.mrf.mxu0
  %v121 = vadd.f32 %v48, %v120
  %v122 = vpop.f32.mrf.mxu0
  %123 = vdwg.mxu0
  %v124 = vmul.f32 %v121, 0.5
  %v125 = vmul.f32 %v121, 0.70710677
  %v126 = vand.u32 2147483647, %v125
  %v127 = vmul.f32 %v126, 0.3275911
  %v128 = vadd.f32 %v127, 1.0
  %v129 = vrcp.pop %v128
  %v130 = vmul.f32 1.0, %v129
  %v131 = vmul.f32 %v130, 1.0614054
  %v132 = vadd.f32 %v131, -1.4531521
  %v133 = vmul.f32 %v132, %v130
  %v134 = vadd.f32 %v133, 1.4214138
  %v135 = vmul.f32 %v134, %v130
  %v136 = vadd.f32 %v135, -0.28449672
  %v137 = vmul.f32 %v136, %v130
  %v138 = vadd.f32 %v137, 0.2548296
  %v139 = vmul.f32 %v138, %v130
  %v140 = vmul.f32 %v126, %v126
  %v141 = vsub.f32 0.0, %v140
  %v142 = vmul.f32 %v141, 1.442695
  %v143 = vpow.pop %v142
  %v144 = vmul.f32 %v139, %v143
  %v145 = vsub.f32 1.0, %v144
  %vm146 = vcmp.lt.f32.partialorder %v125, 0.0
  %v147 = vsub.f32 0.0, %v145
  %v148 = vsel %vm146, %v147, %v145
  %v149 = vadd.f32 %v148, 1.0
  %v150 = vmul.f32 %v124, %v149
  %v151 = vld [vmem:[%s3] sm:$0xff]
  %v152 = vld [vmem:[%s3 + $0x8] sm:$0xff]
  %v153 = vld [vmem:[%s3 + $0x10] sm:$0xff]
  %v154 = vld [vmem:[%s3 + $0x18] sm:$0xff]
  %v155 = vld [vmem:[%s3 + $0x20] sm:$0xff]
  %v156 = vld [vmem:[%s3 + $0x28] sm:$0xff]
  %v157 = vld [vmem:[%s3 + $0x30] sm:$0xff]
  %v158 = vld [vmem:[%s3 + $0x38] sm:$0xff]
  %v159 = vld [vmem:[%s3 + $0x40] sm:$0xff]
  %v160 = vld [vmem:[%s3 + $0x48] sm:$0xff]
  %v161 = vld [vmem:[%s3 + $0x50] sm:$0xff]
  %v162 = vld [vmem:[%s3 + $0x58] sm:$0xff]
  %v163 = vld [vmem:[%s3 + $0x60] sm:$0xff]
  %v164 = vld [vmem:[%s3 + $0x68] sm:$0xff]
  %v165 = vld [vmem:[%s3 + $0x70] sm:$0xff]
  %v166 = vld [vmem:[%s3 + $0x78] sm:$0xff]
  %v167 = vld [vmem:[%s4] sm:$0x1]
  %v169 = vlaneseq
  %v170 = vshrl.u32 %v169, 7
  %v171 = vsub.s32 0, %v170
  %v172 = vrot.slane %v167, %v171
  %174 = vmatprep.subr.mxu0 0.0
  %175 = vmatpush1.msra.mxu0 %v166
  %176 = vmatprep.subr.mxu0 0.0
  %177 = vmatpush1.msra.mxu0 %v165
  %178 = vmatprep.subr.mxu0 0.0
  %179 = vmatpush1.msra.mxu0 %v164
  %180 = vmatprep.subr.mxu0 0.0
  %181 = vmatpush1.msra.mxu0 %v163
  %182 = vmatprep.subr.mxu0 0.0
  %183 = vmatpush1.msra.mxu0 %v162
  %184 = vmatprep.subr.mxu0 0.0
  %185 = vmatpush1.msra.mxu0 %v161
  %186 = vmatprep.subr.mxu0 0.0
  %187 = vmatpush1.msra.mxu0 %v160
  %188 = vmatprep.subr.mxu0 0.0
  %189 = vmatpush1.msra.mxu0 %v159
  %190 = vmatprep.subr.mxu0 0.0
  %191 = vmatpush1.msra.mxu0 %v158
  %192 = vmatprep.subr.mxu0 0.0
  %193 = vmatpush1.msra.mxu0 %v157
  %194 = vmatprep.subr.mxu0 0.0
  %195 = vmatpush1.msra.mxu0 %v156
  %196 = vmatprep.subr.mxu0 0.0
  %197 = vmatpush1.msra.mxu0 %v155
  %198 = vmatprep.subr.mxu0 0.0
  %199 = vmatpush1.msra.mxu0 %v154
  %200 = vmatprep.subr.mxu0 0.0
  %201 = vmatpush1.msra.mxu0 %v153
  %202 = vmatprep.subr.mxu0 0.0
  %203 = vmatpush1.msra.mxu0 %v152
  %204 = vmatprep.subr.mxu0 0.0
  %205 = vmatpush1.msra.mxu0 %v151
  %206 = vmatprep.subr.mxu0 0.0
  %207 = vmatpush2.msra.mxu0 0.0
  %208 = vmatprep.subr.mxu0 0.0
  %209 = vmatpush2.msra.mxu0 0.0
  %210 = vmatprep.subr.mxu0 0.0
  %211 = vmatpush2.msra.mxu0 0.0
  %212 = vmatprep.subr.mxu0 0.0
  %213 = vmatpush2.msra.mxu0 0.0
  %214 = vmatprep.subr.mxu0 0.0
  %215 = vmatpush2.msra.mxu0 0.0
  %216 = vmatprep.subr.mxu0 0.0
  %217 = vmatpush2.msra.mxu0 0.0
  %218 = vmatprep.subr.mxu0 0.0
  %219 = vmatpush2.msra.mxu0 0.0
  %220 = vmatprep.subr.mxu0 0.0
  %221 = vmatpush2.msra.mxu0 0.0
  %222 = vmatprep.subr.mxu0 0.0
  %223 = vmatpush2.msra.mxu0 0.0
  %224 = vmatprep.subr.mxu0 0.0
  %225 = vmatpush2.msra.mxu0 0.0
  %226 = vmatprep.subr.mxu0 0.0
  %227 = vmatpush2.msra.mxu0 0.0
  %228 = vmatprep.subr.mxu0 0.0
  %229 = vmatpush2.msra.mxu0 0.0
  %230 = vmatprep.subr.mxu0 0.0
  %231 = vmatpush2.msra.mxu0 0.0
  %232 = vmatprep.subr.mxu0 0.0
  %233 = vmatpush2.msra.mxu0 0.0
  %234 = vmatprep.subr.mxu0 0.0
  %235 = vmatpush2.msra.mxu0 0.0
  %236 = vmatprep.subr.mxu0 0.0
  %237 = vmatpush2.msra.mxu0 0.0
  %238 = vmatprep.mubr.f32.mxu0 0.0
  %239 = vmatmul.mubr.f32.gmra.mxu0 %v150
  %v240 = vpop.f32.mrf.mxu0
  %v241 = vadd.f32 %v172, %v240
  %v242 = vpop.f32.mrf.mxu0
  %243 = vdwg.mxu0
  %v244 = vmul.f32 %v241, 0.5
  %v245 = vmul.f32 %v241, 0.70710677
  %v246 = vand.u32 2147483647, %v245
  %v247 = vmul.f32 %v246, 0.3275911
  %v248 = vadd.f32 %v247, 1.0
  %v249 = vrcp.pop %v248
  %v250 = vmul.f32 1.0, %v249
  %v251 = vmul.f32 %v250, 1.0614054
  %v252 = vadd.f32 %v251, -1.4531521
  %v253 = vmul.f32 %v252, %v250
  %v254 = vadd.f32 %v253, 1.4214138
  %v255 = vmul.f32 %v254, %v250
  %v256 = vadd.f32 %v255, -0.28449672
  %v257 = vmul.f32 %v256, %v250
  %v258 = vadd.f32 %v257, 0.2548296
  %v259 = vmul.f32 %v258, %v250
  %v260 = vmul.f32 %v246, %v246
  %v261 = vsub.f32 0.0, %v260
  %v262 = vmul.f32 %v261, 1.442695
  %v263 = vpow.pop %v262
  %v264 = vmul.f32 %v259, %v263
  %v265 = vsub.f32 1.0, %v264
  %vm266 = vcmp.lt.f32.partialorder %v245, 0.0
  %v267 = vsub.f32 0.0, %v265
  %v268 = vsel %vm266, %v267, %v265
  %v269 = vadd.f32 %v268, 1.0
  %v270 = vmul.f32 %v244, %v269
  %v271 = vld [vmem:[%s5] sm:$0xff]
  %v272 = vld [vmem:[%s5 + $0x8] sm:$0xff]
  %v273 = vld [vmem:[%s5 + $0x10] sm:$0xff]
  %v274 = vld [vmem:[%s5 + $0x18] sm:$0xff]
  %v275 = vld [vmem:[%s5 + $0x20] sm:$0xff]
  %v276 = vld [vmem:[%s5 + $0x28] sm:$0xff]
  %v277 = vld [vmem:[%s5 + $0x30] sm:$0xff]
  %v278 = vld [vmem:[%s5 + $0x38] sm:$0xff]
  %v279 = vld [vmem:[%s6] sm:$0x1]
  %v281 = vlaneseq
  %v282 = vshrl.u32 %v281, 7
  %v283 = vsub.s32 0, %v282
  %v284 = vrot.slane %v279, %v283
  %vm286 = vcmask 523264
  %v288 = vsel %vm286, %v270, 0
  %290 = vmatprep.subr.mxu0 0.0
  %291 = vmatpush1.msra.mxu0 0.0
  %292 = vmatprep.subr.mxu0 0.0
  %293 = vmatpush1.msra.mxu0 0.0
  %294 = vmatprep.subr.mxu0 0.0
  %295 = vmatpush1.msra.mxu0 0.0
  %296 = vmatprep.subr.mxu0 0.0
  %297 = vmatpush1.msra.mxu0 0.0
  %298 = vmatprep.subr.mxu0 0.0
  %299 = vmatpush1.msra.mxu0 0.0
  %300 = vmatprep.subr.mxu0 0.0
  %301 = vmatpush1.msra.mxu0 0.0
  %302 = vmatprep.subr.mxu0 0.0
  %303 = vmatpush1.msra.mxu0 0.0
  %304 = vmatprep.subr.mxu0 0.0
  %305 = vmatpush1.msra.mxu0 0.0
  %306 = vmatprep.subr.mxu0 0.0
  %307 = vmatpush1.msra.mxu0 %v278
  %308 = vmatprep.subr.mxu0 0.0
  %309 = vmatpush1.msra.mxu0 %v277
  %310 = vmatprep.subr.mxu0 0.0
  %311 = vmatpush1.msra.mxu0 %v276
  %312 = vmatprep.subr.mxu0 0.0
  %313 = vmatpush1.msra.mxu0 %v275
  %314 = vmatprep.subr.mxu0 0.0
  %315 = vmatpush1.msra.mxu0 %v274
  %316 = vmatprep.subr.mxu0 0.0
  %317 = vmatpush1.msra.mxu0 %v273
  %318 = vmatprep.subr.mxu0 0.0
  %319 = vmatpush1.msra.mxu0 %v272
  %320 = vmatprep.subr.mxu0 0.0
  %321 = vmatpush1.msra.mxu0 %v271
  %322 = vmatprep.subr.mxu0 0.0
  %323 = vmatpush2.msra.mxu0 0.0
  %324 = vmatprep.subr.mxu0 0.0
  %325 = vmatpush2.msra.mxu0 0.0
  %326 = vmatprep.subr.mxu0 0.0
  %327 = vmatpush2.msra.mxu0 0.0
  %328 = vmatprep.subr.mxu0 0.0
  %329 = vmatpush2.msra.mxu0 0.0
  %330 = vmatprep.subr.mxu0 0.0
  %331 = vmatpush2.msra.mxu0 0.0
  %332 = vmatprep.subr.mxu0 0.0
  %333 = vmatpush2.msra.mxu0 0.0
  %334 = vmatprep.subr.mxu0 0.0
  %335 = vmatpush2.msra.mxu0 0.0
  %336 = vmatprep.subr.mxu0 0.0
  %337 = vmatpush2.msra.mxu0 0.0
  %338 = vmatprep.subr.mxu0 0.0
  %339 = vmatpush2.msra.mxu0 0.0
  %340 = vmatprep.subr.mxu0 0.0
  %341 = vmatpush2.msra.mxu0 0.0
  %342 = vmatprep.subr.mxu0 0.0
  %343 = vmatpush2.msra.mxu0 0.0
  %344 = vmatprep.subr.mxu0 0.0
  %345 = vmatpush2.msra.mxu0 0.0
  %346 = vmatprep.subr.mxu0 0.0
  %347 = vmatpush2.msra.mxu0 0.0
  %348 = vmatprep.subr.mxu0 0.0
  %349 = vmatpush2.msra.mxu0 0.0
  %350 = vmatprep.subr.mxu0 0.0
  %351 = vmatpush2.msra.mxu0 0.0
  %352 = vmatprep.subr.mxu0 0.0
  %353 = vmatpush2.msra.mxu0 0.0
  %354 = vmatprep.mubr.f32.mxu0 0.0
  %355 = vmatmul.mubr.f32.gmra.mxu0 %v288
  %v356 = vpop.f32.mrf.mxu0
  %v357 = vadd.f32 %v284, %v356
  %v358 = vpop.f32.mrf.mxu0
  %359 = vdwg.mxu0
  %v360 = vmul.f32 %v357, 0.5
  %v361 = vmul.f32 %v357, 0.70710677
  %v362 = vand.u32 2147483647, %v361
  %v363 = vmul.f32 %v362, 0.3275911
  %v364 = vadd.f32 %v363, 1.0
  %v365 = vrcp.pop %v364
  %v366 = vmul.f32 1.0, %v365
  %v367 = vmul.f32 %v366, 1.0614054
  %v368 = vadd.f32 %v367, -1.4531521
  %v369 = vmul.f32 %v368, %v366
  %v370 = vadd.f32 %v369, 1.4214138
  %v371 = vmul.f32 %v370, %v366
  %v372 = vadd.f32 %v371, -0.28449672
  %v373 = vmul.f32 %v372, %v366
  %v374 = vadd.f32 %v373, 0.2548296
  %v375 = vmul.f32 %v374, %v366
  %v376 = vmul.f32 %v362, %v362
  %v377 = vsub.f32 0.0, %v376
  %v378 = vmul.f32 %v377, 1.442695
  %v379 = vpow.pop %v378
  %v380 = vmul.f32 %v375, %v379
  %v381 = vsub.f32 1.0, %v380
  %vm382 = vcmp.lt.f32.partialorder %v361, 0.0
  %v383 = vsub.f32 0.0, %v381
  %v384 = vsel %vm382, %v383, %v381
  %v385 = vadd.f32 %v384, 1.0
  %v386 = vmul.f32 %v360, %v385
  %v387 = vld [vmem:[%s7] sm:$0xff]
  %v388 = vld [vmem:[%s7 + $0x8] sm:$0xff]
  %v389 = vld [vmem:[%s7 + $0x10] sm:$0xff]
  %v390 = vld [vmem:[%s7 + $0x18] sm:$0xff]
  %v391 = vld [vmem:[%s8] sm:$0x1]
  %v393 = vlaneseq
  %v394 = vshrl.u32 %v393, 7
  %v395 = vsub.s32 0, %v394
  %v396 = vrot.slane %v391, %v395
  %vm398 = vcmask 261120
  %v400 = vsel %vm398, %v386, 0
  %402 = vmatprep.subr.mxu0 0.0
  %403 = vmatpush1.msra.mxu0 0.0
  %404 = vmatprep.subr.mxu0 0.0
  %405 = vmatpush1.msra.mxu0 0.0
  %406 = vmatprep.subr.mxu0 0.0
  %407 = vmatpush1.msra.mxu0 0.0
  %408 = vmatprep.subr.mxu0 0.0
  %409 = vmatpush1.msra.mxu0 0.0
  %410 = vmatprep.subr.mxu0 0.0
  %411 = vmatpush1.msra.mxu0 0.0
  %412 = vmatprep.subr.mxu0 0.0
  %413 = vmatpush1.msra.mxu0 0.0
  %414 = vmatprep.subr.mxu0 0.0
  %415 = vmatpush1.msra.mxu0 0.0
  %416 = vmatprep.subr.mxu0 0.0
  %417 = vmatpush1.msra.mxu0 0.0
  %418 = vmatprep.subr.mxu0 0.0
  %419 = vmatpush1.msra.mxu0 0.0
  %420 = vmatprep.subr.mxu0 0.0
  %421 = vmatpush1.msra.mxu0 0.0
  %422 = vmatprep.subr.mxu0 0.0
  %423 = vmatpush1.msra.mxu0 0.0
  %424 = vmatprep.subr.mxu0 0.0
  %425 = vmatpush1.msra.mxu0 0.0
  %426 = vmatprep.subr.mxu0 0.0
  %427 = vmatpush1.msra.mxu0 %v390
  %428 = vmatprep.subr.mxu0 0.0
  %429 = vmatpush1.msra.mxu0 %v389
  %430 = vmatprep.subr.mxu0 0.0
  %431 = vmatpush1.msra.mxu0 %v388
  %432 = vmatprep.subr.mxu0 0.0
  %433 = vmatpush1.msra.mxu0 %v387
  %434 = vmatprep.subr.mxu0 0.0
  %435 = vmatpush2.msra.mxu0 0.0
  %436 = vmatprep.subr.mxu0 0.0
  %437 = vmatpush2.msra.mxu0 0.0
  %438 = vmatprep.subr.mxu0 0.0
  %439 = vmatpush2.msra.mxu0 0.0
  %440 = vmatprep.subr.mxu0 0.0
  %441 = vmatpush2.msra.mxu0 0.0
  %442 = vmatprep.subr.mxu0 0.0
  %443 = vmatpush2.msra.mxu0 0.0
  %444 = vmatprep.subr.mxu0 0.0
  %445 = vmatpush2.msra.mxu0 0.0
  %446 = vmatprep.subr.mxu0 0.0
  %447 = vmatpush2.msra.mxu0 0.0
  %448 = vmatprep.subr.mxu0 0.0
  %449 = vmatpush2.msra.mxu0 0.0
  %450 = vmatprep.subr.mxu0 0.0
  %451 = vmatpush2.msra.mxu0 0.0
  %452 = vmatprep.subr.mxu0 0.0
  %453 = vmatpush2.msra.mxu0 0.0
  %454 = vmatprep.subr.mxu0 0.0
  %455 = vmatpush2.msra.mxu0 0.0
  %456 = vmatprep.subr.mxu0 0.0
  %457 = vmatpush2.msra.mxu0 0.0
  %458 = vmatprep.subr.mxu0 0.0
  %459 = vmatpush2.msra.mxu0 0.0
  %460 = vmatprep.subr.mxu0 0.0
  %461 = vmatpush2.msra.mxu0 0.0
  %462 = vmatprep.subr.mxu0 0.0
  %463 = vmatpush2.msra.mxu0 0.0
  %464 = vmatprep.subr.mxu0 0.0
  %465 = vmatpush2.msra.mxu0 0.0
  %466 = vmatprep.mubr.f32.mxu0 0.0
  %467 = vmatmul.mubr.f32.gmra.mxu0 %v400
  %v468 = vpop.f32.mrf.mxu0
  %v469 = vadd.f32 %v396, %v468
  %v470 = vpop.f32.mrf.mxu0
  %471 = vdwg.mxu0
  %472 = vst [vmem:[%s9] sm:$0xff] %v469
  // Predicated region
  $region38: #{critic_forward.1} parent=0 // pred_check
    _
  $region39: #{critic_forward.1} parent=0 // pred_check_branch
    %474 = sbr.rel (0) target = $region41
  $region40: #{critic_forward.1} parent=0 // pred_region
    _
  $region41: #{critic_forward.1} parent=0 // pred_fallthru
    _
  // Predicated region
  $region42: #{critic_forward.1} parent=0 // pred_check
    _
  $region43: #{critic_forward.1} parent=0 // pred_check_branch
    %476 = sbr.rel (0) target = $region45
  $region44: #{critic_forward.1} parent=0 // pred_region
    _
  $region45: #{critic_forward.1} parent=0 // pred_fallthru
    _

</llo_original>
